<compile_context>
chip_gen: v6e
topology: v6e:2x2x1
jax: 0.10.0
libtpu: 0.0.40
codegen_flags: <defaults>
</compile_context>

<pallas_src>
import functools
import math

import jax
import jax.numpy as jnp
from jax.experimental import pallas as pl
from jax.experimental.pallas import tpu as pltpu

LN_EPS = 1e-5            # nn.LayerNorm default eps
MAX_ROW_TILE = 256       # tokens per grid step for the row-wise kernels; sweep up to 512 on
                         # v5e/v6e (128 MiB VMEM), keep 128-256 on v7x (64 MiB/TC).
VMEM_LIMIT = 64 * 1024 * 1024   # explicit scoped-VMEM ceiling (default is only 16/32 MiB)


def _row_tile(n):
    return n if n <= MAX_ROW_TILE else MAX_ROW_TILE


def _const(shape):
    # Constant block index -> the block never changes across grid steps, so single-buffer it
    # (pl.Buffered(1)) and halve its VMEM footprint; no refetch happens either way.
    return pl.BlockSpec(shape, lambda *_: (0,) * len(shape), pipeline_mode=pl.Buffered(1))


def _layernorm_f32(x, gamma, beta, eps=LN_EPS):
    # Two-pass (x - mean) form: avoids the E[x^2]-E[x]^2 catastrophic cancellation.
    mean = jnp.mean(x, axis=-1, keepdims=True)
    c = x - mean
    var = jnp.mean(c * c, axis=-1, keepdims=True)
    return c * jax.lax.rsqrt(var + eps) * gamma + beta


# -----------------------------------------------------------------------------
# Kernel 1: fused QKV projection   qkv = x @ Wqkv^T + bqkv        (row-tiled)
# -----------------------------------------------------------------------------
def _qkv_kernel(x_ref, w_ref, b_ref, out_ref):
    out = jnp.dot(x_ref[...], w_ref[...], preferred_element_type=jnp.float32)
    out_ref[...] = (out + b_ref[...].astype(jnp.float32)).astype(out_ref.dtype)


def _qkv_proj(x2, w_in_t, b_in2):
    n, d = x2.shape
    d3 = w_in_t.shape[1]
    tm = _row_tile(n)
    # TODO(synk): for very large D on v7x, add an output-column grid axis so only a column
    # slab of W_in is resident per step.
    return pl.pallas_call(
        _qkv_kernel,
        out_shape=jax.ShapeDtypeStruct((n, d3), x2.dtype),
        grid=(pl.cdiv(n, tm),),
        in_specs=[
            pl.BlockSpec((tm, d), lambda i: (i, 0)),      # x rows (double-buffered)
            _const((d, d3)),                              # Wqkv^T, resident, single-buffered
            _const((1, d3)),                              # bias
        ],
        out_specs=pl.BlockSpec((tm, d3), lambda i: (i, 0)),
        compiler_params=pltpu.CompilerParams(
            dimension_semantics=("parallel",), vmem_limit_bytes=VMEM_LIMIT),
    )(x2, w_in_t, b_in2)


# -----------------------------------------------------------------------------
# Kernel 2: scaled-dot-product attention, one batch element (all heads) per step.
# Reads q/k/v head slabs directly from the fused (B, S, 3D) QKV buffer (no wrapper
# transposes) and stores the full (S, D) output slab lane-dense.
# -----------------------------------------------------------------------------
def _attention_kernel(qkv_ref, o_ref, *, n_heads, d_model, scale):
    qkv = qkv_ref[...]                                   # (S, 3D), native dtype
    hd = d_model // n_heads
    outs = []
    # TODO(synk): for long sequences add flash-style KV tiling (second grid axis with
    # running max/sum scratch) instead of materializing the full SxS score tile, and pair
    # heads so the q.k^T contraction width is >=128 on the 256-wide MXU.
    for h in range(n_heads):
        q = qkv[:, h * hd:(h + 1) * hd] * scale
        k = qkv[:, d_model + h * hd: d_model + (h + 1) * hd]
        v = qkv[:, 2 * d_model + h * hd: 2 * d_model + (h + 1) * hd]
        # scores = q @ k^T (contract head_dim) -> (S, S), f32 accumulator.
        s = jax.lax.dot_general(q, k, (((1,), (1,)), ((), ())),
                                preferred_element_type=jnp.float32)
        s = s - jnp.max(s, axis=-1, keepdims=True)
        p = jnp.exp(s)
        denom = jnp.sum(p, axis=-1, keepdims=True)
        o = jnp.dot(p.astype(v.dtype), v, preferred_element_type=jnp.float32)
        # Deferred softmax normalization: scale the (S, hd) output, not the (S, S) tile.
        outs.append(o * (1.0 / denom))
    o_ref[...] = jnp.concatenate(outs, axis=-1).astype(o_ref.dtype)


def _attention(qkv_b, n_heads, d_model, scale):
    b, s, d3 = qkv_b.shape
    return pl.pallas_call(
        functools.partial(_attention_kernel, n_heads=n_heads, d_model=d_model, scale=scale),
        out_shape=jax.ShapeDtypeStruct((b, s, d_model), qkv_b.dtype),
        grid=(b,),
        in_specs=[pl.BlockSpec((None, s, d3), lambda bi: (bi, 0, 0))],
        out_specs=pl.BlockSpec((None, s, d_model), lambda bi: (bi, 0, 0)),
        compiler_params=pltpu.CompilerParams(
            dimension_semantics=("parallel",), vmem_limit_bytes=VMEM_LIMIT),
    )(qkv_b)


# -----------------------------------------------------------------------------
# Kernel 3: out-proj + residual + LN1 + FFN + residual + LN2     (row-tiled, fused)
# -----------------------------------------------------------------------------
def _post_attn_kernel(attn_ref, resid_ref,
                      wo_ref, bo_ref, g1_ref, be1_ref,
                      w1_ref, b1_ref, w2_ref, b2_ref, g2_ref, be2_ref,
                      out_ref, *, activation):
    # MXU matmuls take operands in their native dtype; elementwise math in f32.
    h = jnp.dot(attn_ref[...], wo_ref[...], preferred_element_type=jnp.float32)
    h = h + bo_ref[...].astype(jnp.float32) + resid_ref[...].astype(jnp.float32)
    y = _layernorm_f32(h, g1_ref[...].astype(jnp.float32), be1_ref[...].astype(jnp.float32))

    f = jnp.dot(y.astype(w1_ref.dtype), w1_ref[...],
                preferred_element_type=jnp.float32) + b1_ref[...].astype(jnp.float32)
    if activation == "relu":
        f = jnp.maximum(f, 0.0)
    elif activation == "gelu":
        f = 0.5 * f * (1.0 + jax.lax.erf(f * (1.0 / math.sqrt(2.0))))  # exact erf-gelu
    else:
        raise ValueError(f"Unsupported activation: {activation}")
    # TODO(synk): attn/act/ff dropout layers are identity in eval mode; training-mode masking omitted.
    g = jnp.dot(f.astype(w2_ref.dtype), w2_ref[...],
                preferred_element_type=jnp.float32) + b2_ref[...].astype(jnp.float32) + y
    out_ref[...] = _layernorm_f32(g, g2_ref[...].astype(jnp.float32),
                                  be2_ref[...].astype(jnp.float32)).astype(out_ref.dtype)


def _post_attention(attn2, x2, wo_t, bo2, g1, be1, w1_t, b1f, w2_t, b2f, g2, be2, activation):
    n, d = x2.shape
    ff = w1_t.shape[1]
    tm = _row_tile(n)
    row = lambda i: (i, 0)
    # TODO(synk): for D>=2048 / FF>=8192 on v7x the single-buffered weight set no longer fits
    # 64 MiB/TC: split into (out-proj+LN1) and (FFN+LN2) calls or add an FF grid axis.
    return pl.pallas_call(
        functools.partial(_post_attn_kernel, activation=activation),
        out_shape=jax.ShapeDtypeStruct((n, d), x2.dtype),
        grid=(pl.cdiv(n, tm),),
        in_specs=[
            pl.BlockSpec((tm, d), row),          # attention output rows (double-buffered)
            pl.BlockSpec((tm, d), row),          # residual rows
            _const((d, d)),                      # Wo^T  (single-buffered, resident)
            _const((1, d)),                      # bo
            _const((1, d)),                      # gamma1
            _const((1, d)),                      # beta1
            _const((d, ff)),                     # W1^T
            _const((1, ff)),                     # b1
            _const((ff, d)),                     # W2^T
            _const((1, d)),                      # b2
            _const((1, d)),                      # gamma2
            _const((1, d)),                      # beta2
        ],
        out_specs=pl.BlockSpec((tm, d), row),
        compiler_params=pltpu.CompilerParams(
            dimension_semantics=("parallel",), vmem_limit_bytes=VMEM_LIMIT),
    )(attn2, x2, wo_t, bo2, g1, be1, w1_t, b1f, w2_t, b2f, g2, be2)


# -----------------------------------------------------------------------------
# Full layer wrapper
# -----------------------------------------------------------------------------
def transformer_encoder_layer(x, params, n_heads, activation="relu",
                              key_padding_mask=None, attn_mask=None):
    """x: (S, B, D) — PyTorch nn.MultiheadAttention default (seq, batch, embed) layout."""
    if key_padding_mask is not None or attn_mask is not None:
        # TODO(synk): masked attention not implemented (module defaults are None).
        raise NotImplementedError("key_padding_mask / attn_mask not supported")

    s, b, d = x.shape
    assert d % n_heads == 0
    hd = d // n_heads
    scale = 1.0 / math.sqrt(hd)
    n = s * b

    # Single layout transpose to batch-major; everything downstream works on contiguous
    # (B*S, D) rows and attention indexes heads straight out of the QKV buffer.
    xb = jnp.transpose(x, (1, 0, 2))          # (B, S, D)
    x2 = xb.reshape(n, d)

    # Wrapper-side layout plumbing: pre-transpose weights once so kernels do plain x @ W.
    # NOTE: for production, provide params in bf16 so the MXU runs at bf16 rate.
    w_in_t = params["w_in"].T                 # (D, 3D)
    wo_t = params["w_out"].T                  # (D, D)
    w1_t = params["w1"].T                     # (D, FF)
    w2_t = params["w2"].T                     # (FF, D)
    b_in2 = params["b_in"].reshape(1, -1)
    bo2 = params["b_out"].reshape(1, -1)
    b1f = params["b1"].reshape(1, -1)
    b2f = params["b2"].reshape(1, -1)
    g1 = params["g1"].reshape(1, -1)
    be1 = params["be1"].reshape(1, -1)
    g2 = params["g2"].reshape(1, -1)
    be2 = params["be2"].reshape(1, -1)

    # 1) fused QKV projection (row-tiled matmul)
    qkv = _qkv_proj(x2, w_in_t, b_in2)                 # (N, 3D), batch-major rows
    qkv_b = qkv.reshape(b, s, 3 * d)                   # free reshape, no data movement

    # 2) attention: one batch element per step, head slabs sliced inside the kernel,
    #    output written lane-dense into (B, S, D)
    attn_b = _attention(qkv_b, n_heads, d, scale)      # (B, S, D)
    attn2 = attn_b.reshape(n, d)

    # 3) out-proj + residual + LN1 + FFN + residual + LN2, fused into one row-tiled kernel
    out2 = _post_attention(attn2, x2, wo_t, bo2, g1, be1,
                           w1_t, b1f, w2_t, b2f, g2, be2, activation)
    return jnp.transpose(out2.reshape(b, s, d), (1, 0, 2))   # back to (S, B, D)


# -----------------------------------------------------------------------------
# Pure-JAX reference (matches PyTorch eval-mode semantics)
# -----------------------------------------------------------------------------
def _reference(x, p, n_heads, activation):
    s, b, d = x.shape
    hd = d // n_heads
    scale = 1.0 / math.sqrt(hd)
    x2 = x.reshape(s * b, d)

    qkv = x2 @ p["w_in"].T + p["b_in"]
    qkv = qkv.reshape(s, b, 3, n_heads, hd)
    q = jnp.transpose(qkv[:, :, 0], (1, 2, 0, 3))
    k = jnp.transpose(qkv[:, :, 1], (1, 2, 0, 3))
    v = jnp.transpose(qkv[:, :, 2], (1, 2, 0, 3))
    sc = jnp.einsum("bhqd,bhkd->bhqk", q * scale, k)
    pr = jax.nn.softmax(sc, axis=-1)
    o = jnp.einsum("bhqk,bhkd->bhqd", pr, v)
    o = jnp.transpose(o, (2, 0, 1, 3)).reshape(s * b, d)

    def ln(z, g, be):
        m = jnp.mean(z, axis=-1, keepdims=True)
        var = jnp.mean((z - m) ** 2, axis=-1, keepdims=True)
        return (z - m) / jnp.sqrt(var + LN_EPS) * g + be

    h = o @ p["w_out"].T + p["b_out"] + x2
    y = ln(h, p["g1"], p["be1"])
    f = y @ p["w1"].T + p["b1"]
    if activation == "relu":
        f = jnp.maximum(f, 0.0)
    else:
        f = 0.5 * f * (1.0 + jax.lax.erf(f / math.sqrt(2.0)))
    g = f @ p["w2"].T + p["b2"] + y
    return ln(g, p["g2"], p["be2"]).reshape(s, b, d)


if __name__ == "__main__":
    S, B, D, H, FF = 8, 2, 32, 4, 64
    ACT = "relu"

    key = jax.random.PRNGKey(0)
    ks = jax.random.split(key, 12)
    params = {
        "w_in":  jax.random.normal(ks[0], (3 * D, D), jnp.float32) * 0.1,
        "b_in":  jax.random.normal(ks[1], (3 * D,), jnp.float32) * 0.1,
        "w_out": jax.random.normal(ks[2], (D, D), jnp.float32) * 0.1,
        "b_out": jax.random.normal(ks[3], (D,), jnp.float32) * 0.1,
        "g1":    1.0 + 0.1 * jax.random.normal(ks[4], (D,), jnp.float32),
        "be1":   0.1 * jax.random.normal(ks[5], (D,), jnp.float32),
        "w1":    jax.random.normal(ks[6], (FF, D), jnp.float32) * 0.1,
        "b1":    jax.random.normal(ks[7], (FF,), jnp.float32) * 0.1,
        "w2":    jax.random.normal(ks[8], (D, FF), jnp.float32) * 0.1,
        "b2":    jax.random.normal(ks[9], (D,), jnp.float32) * 0.1,
        "g2":    1.0 + 0.1 * jax.random.normal(ks[10], (D,), jnp.float32),
        "be2":   0.1 * jax.random.normal(ks[11], (D,), jnp.float32),
    }
    x = jax.random.normal(jax.random.PRNGKey(1), (S, B, D), jnp.float32)

    out = transformer_encoder_layer(x, params, n_heads=H, activation=ACT)
    out = jax.block_until_ready(out)

    ref = _reference(x, params, H, ACT)
    assert out.shape == (S, B, D)
    assert jnp.allclose(out, ref, atol=1e-4, rtol=1e-4), "Pallas output mismatch vs JAX reference"

    print("KERNEL_OK")
</pallas_src>

<mosaic_0001>
module attributes {stable_mosaic.version = 11 : i64} {
  func.func @_qkv_kernel(%arg0: i32, %arg1: memref<16x32xf32, #tpu.memory_space<vmem>>, %arg2: memref<32x96xf32, #tpu.memory_space<vmem>>, %arg3: memref<1x96xf32, #tpu.memory_space<vmem>>, %arg4: memref<16x96xf32, #tpu.memory_space<vmem>>) attributes {dimension_semantics = [#tpu.dimension_semantics<parallel>], iteration_bounds = array<i64: 1>, scalar_prefetch = 0 : i64, scratch_operands = 0 : i64, tpu.core_type = #tpu.core_type<tc>, window_params = [{transform_indices = @transform_0, window_bounds = array<i64: 16, 32>}, {pipeline_mode = #tpu.pipeline_mode<synchronous>, transform_indices = @transform_1, window_bounds = array<i64: 32, 96>}, {pipeline_mode = #tpu.pipeline_mode<synchronous>, transform_indices = @transform_2, window_bounds = array<i64: 1, 96>}, {transform_indices = @transform_3, window_bounds = array<i64: 16, 96>}]} {
    %c0 = arith.constant 0 : index
    %c0_0 = arith.constant 0 : index
    %0 = vector.load %arg1[%c0, %c0_0] : memref<16x32xf32, #tpu.memory_space<vmem>>, vector<16x32xf32>
    %c0_1 = arith.constant 0 : index
    %c0_2 = arith.constant 0 : index
    %1 = vector.load %arg2[%c0_1, %c0_2] : memref<32x96xf32, #tpu.memory_space<vmem>>, vector<32x96xf32>
    %cst = arith.constant dense<0.000000e+00> : vector<16x96xf32>
    %2 = tpu.matmul %0, %1, %cst {dimension_numbers = #tpu.dot_dimension_numbers<[1], [0], [0], [1], [0, 0, 1, 1], [], []>} : vector<16x32xf32>, vector<32x96xf32>, vector<16x96xf32> -> vector<16x96xf32>
    %c0_3 = arith.constant 0 : index
    %c0_4 = arith.constant 0 : index
    %3 = vector.load %arg3[%c0_3, %c0_4] : memref<1x96xf32, #tpu.memory_space<vmem>>, vector<1x96xf32>
    %4 = vector.broadcast %3 : vector<1x96xf32> to vector<16x96xf32>
    %5 = arith.addf %2, %4 : vector<16x96xf32>
    %c0_5 = arith.constant 0 : index
    %c0_6 = arith.constant 0 : index
    %6 = vector.load %arg4[%c0_5, %c0_6] : memref<16x96xf32, #tpu.memory_space<vmem>>, vector<16x96xf32>
    tpu.vector_store %arg4[%c0_5, %c0_6], %5 {strides = array<i32>} : memref<16x96xf32, #tpu.memory_space<vmem>>, vector<16x96xf32>,
    return
  }
  func.func @transform_0(%arg0: i32) -> (i32, i32) {
    %c0_i32 = arith.constant 0 : i32
    %c0_i32_0 = arith.constant 0 : i32
    return %arg0, %c0_i32 : i32, i32
  }
  func.func @transform_1(%arg0: i32) -> (i32, i32) {
    %c0_i32 = arith.constant 0 : i32
    %c0_i32_0 = arith.constant 0 : i32
    %c0_i32_1 = arith.constant 0 : i32
    return %c0_i32, %c0_i32_0 : i32, i32
  }
  func.func @transform_2(%arg0: i32) -> (i32, i32) {
    %c0_i32 = arith.constant 0 : i32
    %c0_i32_0 = arith.constant 0 : i32
    %c0_i32_1 = arith.constant 0 : i32
    return %c0_i32, %c0_i32_0 : i32, i32
  }
  func.func @transform_3(%arg0: i32) -> (i32, i32) {
    %c0_i32 = arith.constant 0 : i32
    %c0_i32_0 = arith.constant 0 : i32
    return %arg0, %c0_i32 : i32, i32
  }
}

</mosaic_0001>

<llo_original>
// kernel: tpu_custom_call.1
$region0: #{tpu_custom_call.1}
  #allocation0 [shape = 'u32[]', space=smem, size = 0x4, offset = 0x4, fixed_abs, tag = 'smem constant byte address 0x4 - core index']
  #allocation1 [shape = 'u32[144,128]{1,0:T(1,128)}', space=vmem, size = 0x12000, scoped, tag = 'internal scratch']
  %s0 = inlined_call_operand.hbm [shape: f32[16,32], index: 0, kind: input, shape index: {}]
  %s1 = inlined_call_operand.hbm [shape: f32[32,96], index: 1, kind: input, shape index: {}]
  %s2 = inlined_call_operand.vmem [shape: f32[1,96], index: 2, kind: input, shape index: {}]
  %s3 = inlined_call_operand.hbm [shape: f32[16,96], index: 3, kind: output, shape index: {}]
  %s4 = sld [smem:[#allocation0]]
  $region30: #{tpu_custom_call.1} parent=0
    _
  %s6 = ssub.s32 1, %s4
  %s7 = scalar_select 0, %s6, %s4
  $region1: #{tpu_custom_call.1} parent=0
    #allocation2 [shape = 'u8[8192]{0}', space=vmem, size = 0x2000, scoped, tag = 'input window, operand 0, single buffered']
    #allocation3 [shape = 's32[1]{0}', space=sflag, size = 0x4, scoped, tag = 'scoped memory for tpu_custom_call.1']
    #allocation4 [shape = 's32[1]{0}', space=sflag, size = 0x4, scoped, tag = 'scoped memory for tpu_custom_call.1']
    #allocation5 [shape = 'u8[16384]{0}', space=vmem, size = 0x4000, scoped, tag = 'input window, operand 1, single buffered']
    #allocation6 [shape = 's32[1]{0}', space=sflag, size = 0x4, scoped, tag = 'scoped memory for tpu_custom_call.1']
    #allocation7 [shape = 'u8[8192]{0}', space=vmem, size = 0x2000, scoped, tag = 'output window, operand 0, single buffered']
    %8 = vsyncpa [#allocation3], 0
    %9 = vsyncpa [#allocation6], 0
    %10 = vsyncpa [#allocation4], 0
    // Predicated region
    $region2: #{tpu_custom_call.1} parent=1 // pred_check
      _
    $region3: #{tpu_custom_call.1} parent=1 // pred_check_branch
      %12 = sbr.rel (0) target = $region5
    $region4: #{tpu_custom_call.1} parent=1 // pred_region
      %s14 = ssub.s32 256, 256
      %15 = vsyncadd [#allocation3], %s14
      %s16 = sshll.u32 [#allocation2], 4
      %s17 = int_to_ptr.vmem [resolvable:$true] %s16
      %22 = dma.hbm_to_vmem [thread:$0]  %s0, 256, %s17, [#allocation3], 128, 128, 8
    $region5: #{tpu_custom_call.1} parent=1 // pred_fallthru
      _
    // Predicated region
    $region6: #{tpu_custom_call.1} parent=1 // pred_check
      _
    $region7: #{tpu_custom_call.1} parent=1 // pred_check_branch
      %24 = sbr.rel (0) target = $region9
    $region8: #{tpu_custom_call.1} parent=1 // pred_region
      %s26 = ssub.s32 512, 512
      %27 = vsyncadd [#allocation6], %s26
      %s28 = sshll.u32 [#allocation5], 4
      %s29 = int_to_ptr.vmem [resolvable:$true] %s28
      %34 = dma.hbm_to_vmem [thread:$0]  %s1, 512, %s29, [#allocation6], 128, 128, 8
    $region9: #{tpu_custom_call.1} parent=1 // pred_fallthru
      _
    // Predicated region
    $region10: #{tpu_custom_call.1} parent=1 // pred_check
      _
    $region11: #{tpu_custom_call.1} parent=1 // pred_check_branch
      %36 = sbr.rel (0) target = $region13
    $region12: #{tpu_custom_call.1} parent=1 // pred_region
      _
    $region13: #{tpu_custom_call.1} parent=1 // pred_fallthru
      _
    // Predicated region
    $region14: #{tpu_custom_call.1} parent=1 // pred_check
      _
    $region15: #{tpu_custom_call.1} parent=1 // pred_check_branch
      %38 = sbr.rel (0) target = $region17
    $region16: #{tpu_custom_call.1} parent=1 // pred_region
      %39 = dma.done [#allocation3], 256
    $region17: #{tpu_custom_call.1} parent=1 // pred_fallthru
      _
    // Predicated region
    $region18: #{tpu_custom_call.1} parent=1 // pred_check
      _
    $region19: #{tpu_custom_call.1} parent=1 // pred_check_branch
      %41 = sbr.rel (0) target = $region21
    $region20: #{tpu_custom_call.1} parent=1 // pred_region
      %42 = dma.done [#allocation6], 512
    $region21: #{tpu_custom_call.1} parent=1 // pred_fallthru
      _
    %v43 = vld [vmem:[#allocation2] sm:$0xff]
    %v44 = vld [vmem:[#allocation2 + $0x8] sm:$0xff]
    %v45 = vld [vmem:[#allocation5] sm:$0xff]
    %v46 = vld [vmem:[#allocation5 + $0x8] sm:$0xff]
    %v47 = vld [vmem:[#allocation5 + $0x10] sm:$0xff]
    %v48 = vld [vmem:[#allocation5 + $0x18] sm:$0xff]
    %v49 = vld [vmem:[%s2] sm:$0x1]
    %v51 = vlaneseq
    %v52 = vshrl.u32 %v51, 7
    %v53 = vsub.s32 0, %v52
    %v54 = vrot.slane %v49, %v53
    %vm56 = vcmask 261120
    %v58 = vsel %vm56, %v43, 0
    %v61 = vsel %vm56, %v44, 0
    %63 = vmatprep.subr.mxu0 0.0
    %64 = vmatpush1.msra.mxu0 0.0
    %65 = vmatprep.subr.mxu0 0.0
    %66 = vmatpush1.msra.mxu0 0.0
    %67 = vmatprep.subr.mxu0 0.0
    %68 = vmatpush1.msra.mxu0 0.0
    %69 = vmatprep.subr.mxu0 0.0
    %70 = vmatpush1.msra.mxu0 0.0
    %71 = vmatprep.subr.mxu0 0.0
    %72 = vmatpush1.msra.mxu0 0.0
    %73 = vmatprep.subr.mxu0 0.0
    %74 = vmatpush1.msra.mxu0 0.0
    %75 = vmatprep.subr.mxu0 0.0
    %76 = vmatpush1.msra.mxu0 0.0
    %77 = vmatprep.subr.mxu0 0.0
    %78 = vmatpush1.msra.mxu0 0.0
    %79 = vmatprep.subr.mxu0 0.0
    %80 = vmatpush1.msra.mxu0 0.0
    %81 = vmatprep.subr.mxu0 0.0
    %82 = vmatpush1.msra.mxu0 0.0
    %83 = vmatprep.subr.mxu0 0.0
    %84 = vmatpush1.msra.mxu0 0.0
    %85 = vmatprep.subr.mxu0 0.0
    %86 = vmatpush1.msra.mxu0 0.0
    %87 = vmatprep.subr.mxu0 0.0
    %88 = vmatpush1.msra.mxu0 %v48
    %89 = vmatprep.subr.mxu0 0.0
    %90 = vmatpush1.msra.mxu0 %v47
    %91 = vmatprep.subr.mxu0 0.0
    %92 = vmatpush1.msra.mxu0 %v46
    %93 = vmatprep.subr.mxu0 0.0
    %94 = vmatpush1.msra.mxu0 %v45
    %95 = vmatprep.subr.mxu0 0.0
    %96 = vmatpush2.msra.mxu0 0.0
    %97 = vmatprep.subr.mxu0 0.0
    %98 = vmatpush2.msra.mxu0 0.0
    %99 = vmatprep.subr.mxu0 0.0
    %100 = vmatpush2.msra.mxu0 0.0
    %101 = vmatprep.subr.mxu0 0.0
    %102 = vmatpush2.msra.mxu0 0.0
    %103 = vmatprep.subr.mxu0 0.0
    %104 = vmatpush2.msra.mxu0 0.0
    %105 = vmatprep.subr.mxu0 0.0
    %106 = vmatpush2.msra.mxu0 0.0
    %107 = vmatprep.subr.mxu0 0.0
    %108 = vmatpush2.msra.mxu0 0.0
    %109 = vmatprep.subr.mxu0 0.0
    %110 = vmatpush2.msra.mxu0 0.0
    %111 = vmatprep.subr.mxu0 0.0
    %112 = vmatpush2.msra.mxu0 0.0
    %113 = vmatprep.subr.mxu0 0.0
    %114 = vmatpush2.msra.mxu0 0.0
    %115 = vmatprep.subr.mxu0 0.0
    %116 = vmatpush2.msra.mxu0 0.0
    %117 = vmatprep.subr.mxu0 0.0
    %118 = vmatpush2.msra.mxu0 0.0
    %119 = vmatprep.subr.mxu0 0.0
    %120 = vmatpush2.msra.mxu0 0.0
    %121 = vmatprep.subr.mxu0 0.0
    %122 = vmatpush2.msra.mxu0 0.0
    %123 = vmatprep.subr.mxu0 0.0
    %124 = vmatpush2.msra.mxu0 0.0
    %125 = vmatprep.subr.mxu0 0.0
    %126 = vmatpush2.msra.mxu0 0.0
    %127 = vmatprep.mubr.f32.mxu0 0.0
    %128 = vmatmul.mubr.f32.gmra.mxu0 %v58
    %v129 = vpop.f32.mrf.mxu0
    %v130 = vadd.f32 %v54, %v129
    %v131 = vpop.f32.mrf.mxu0
    %132 = vmatprep.mubr.f32.mxu0 0.0
    %133 = vmatmul.mubr.f32.gmra.mxu0 %v61
    %v134 = vpop.f32.mrf.mxu0
    %v135 = vadd.f32 %v54, %v134
    %v136 = vpop.f32.mrf.mxu0
    %137 = vdwg.mxu0
    %vm138 = vcmask 785408
    %139 = vst.msk [vmem:[#allocation7] sm:$0xff] %vm138, %v130
    %140 = vst.msk [vmem:[#allocation7 + $0x8] sm:$0xff] %vm138, %v135
    // Predicated region
    $region22: #{tpu_custom_call.1} parent=1 // pred_check
      _
    $region23: #{tpu_custom_call.1} parent=1 // pred_check_branch
      %142 = sbr.rel (0) target = $region25
    $region24: #{tpu_custom_call.1} parent=1 // pred_region
      %s144 = ssub.s32 256, 256
      %145 = vsyncadd [#allocation4], %s144
      %s146 = sshll.u32 [#allocation7], 4
      %s147 = int_to_ptr.vmem [resolvable:$true] %s146
      %152 = dma.vmem_to_hbm [thread:$0]  %s147, 256, %s3, [#allocation4], 128, 128, 8
    $region25: #{tpu_custom_call.1} parent=1 // pred_fallthru
      _
    // Predicated region
    $region26: #{tpu_custom_call.1} parent=1 // pred_check
      _
    $region27: #{tpu_custom_call.1} parent=1 // pred_check_branch
      %154 = sbr.rel (0) target = $region29
    $region28: #{tpu_custom_call.1} parent=1 // pred_region
      %155 = dma.done [#allocation4], 256
    $region29: #{tpu_custom_call.1} parent=1 // pred_fallthru
      _
    %156 = vsyncpa [#allocation3], 1
    %157 = vsyncpa [#allocation6], 1
    %158 = vsyncpa [#allocation4], 1

</llo_original>
